<compile_context>
chip_gen: v5e
topology: v5e:2x2
jax: 0.10.0
libtpu: 0.0.40
codegen_flags: <defaults>
</compile_context>

<pallas_src>
import math

import jax
import jax.numpy as jnp
from jax.experimental import pallas as pl
from jax.experimental.pallas import tpu as pltpu


# ----------------------------------------------------------------------------
# Pallas kernel: one row-tile of the residual add.
# ----------------------------------------------------------------------------
def _residual_add_kernel(y_ref, r_ref, o_ref):
    # y_ref: (T, C) fn(x) tile,  r_ref: (T, C) residual tile,  o_ref: (T, C)
    o_ref[...] = y_ref[...] + r_ref[...]


def _round_up(x, m):
    return ((x + m - 1) // m) * m


def _round_down(x, m):
    return (x // m) * m


_DEFAULT_VMEM_CAP = 64 * 1024 * 1024  # v7x per-TC capacity (smallest case)


def _vmem_capacity_bytes():
    try:
        return int(pltpu.get_tpu_info().vmem_capacity_bytes)
    except Exception:
        return _DEFAULT_VMEM_CAP


def _lane_dense_2d(shape):
    """Pick a (rows, lanes) view with lanes a 128-multiple whenever the total
    element count allows it.  Pure metadata reshape — no padding, no copy."""
    total = int(math.prod(shape)) if len(shape) else 1
    for lanes in (1024, 896, 768, 640, 512, 384, 256, 128):
        if lanes <= total and total % lanes == 0:
            return total // lanes, lanes
    # Fallback: keep the feature dim as the lane axis (may use masked partial
    # stores when it is not a 128-multiple, but still needs no padding).
    if len(shape) >= 2 and shape[-1] > 0:
        return total // shape[-1], shape[-1]
    return 1, max(total, 1)


def _residual_add(y, res):
    """out = y + res via a single Pallas kernel. Any shape, any float dtype."""
    assert y.shape == res.shape, (y.shape, res.shape)
    assert y.dtype == res.dtype, (y.dtype, res.dtype)
    orig_shape = y.shape

    rows, lanes = _lane_dense_2d(orig_shape)
    y2 = y.reshape(rows, lanes)
    r2 = res.reshape(rows, lanes)

    itemsize = jnp.dtype(y.dtype).itemsize
    # Sublane packing granularity: 8 rows for 32-bit, 16 for bf16, 32 for 8-bit.
    sub = max(8, 32 // max(1, itemsize))

    vmem_cap = _vmem_capacity_bytes()
    vmem_budget = vmem_cap // 4          # budget for all pipelined block buffers
    vmem_limit = vmem_cap // 2           # scoped-VMEM limit with headroom

    row_bytes = lanes * itemsize
    if rows <= sub:
        # Tiny tensor: one block equal to the full (rows, lanes) array.
        tile = rows
    else:
        # Target ~2 MiB per operand block (f32 streaming only reaches ~85% of
        # the HBM roofline once blocks are MiB-scale), then clamp so that
        # (2 inputs + 1 output) x double-buffer fits the VMEM budget.
        # TODO(synk): add lane blocking for pathologically wide rows
        # (row_bytes * 6 * sub > vmem_budget never happens at ViT sizes).
        target_block_bytes = 2 * 1024 * 1024
        tile = max(sub, _round_down(target_block_bytes // row_bytes, sub))
        tile = min(tile, max(sub, _round_down(vmem_budget // (6 * row_bytes), sub)))
        tile = min(tile, max(sub, _round_down(rows, sub)))
        # Prefer >= 4 grid steps: feeds both v7x TensorCores and gives the
        # pipeline something to overlap on v5e/v6e.
        if rows >= 4 * sub:
            tile = min(tile, max(sub, _round_down(rows // 4, sub)))

    grid = (pl.cdiv(rows, tile),)        # ragged last block handled by Pallas
    total = rows * lanes
    cost = pl.CostEstimate(flops=total, transcendentals=0,
                           bytes_accessed=3 * total * itemsize)

    out = pl.pallas_call(
        _residual_add_kernel,
        out_shape=jax.ShapeDtypeStruct((rows, lanes), y.dtype),
        grid_spec=pltpu.PrefetchScalarGridSpec(
            num_scalar_prefetch=0,
            grid=grid,
            in_specs=[
                pl.BlockSpec((tile, lanes), lambda i: (i, 0)),   # fn(x) tile
                pl.BlockSpec((tile, lanes), lambda i: (i, 0)),   # residual tile
            ],
            out_specs=pl.BlockSpec((tile, lanes), lambda i: (i, 0)),
        ),
        compiler_params=pltpu.CompilerParams(
            dimension_semantics=("parallel",),
            vmem_limit_bytes=vmem_limit,
        ),
        cost_estimate=cost,
        # Reuse the fn(x) buffer as the output, mirroring in-place `x += res`.
        input_output_aliases={0: 0},
    )(y2, r2)

    return out.reshape(orig_shape)


# ----------------------------------------------------------------------------
# ResidualConnect.forward
# ----------------------------------------------------------------------------
def residual_connect_forward(x, fn):
    """Returns fn(x) + x.  The residual add runs as a Pallas kernel."""
    # TODO(synk): `fn` is an arbitrary wrapped module, so it is evaluated as a
    # plain JAX callable here; only the residual add itself is a Pallas kernel.
    # (In production, fuse the add into fn's final kernel epilogue instead.)
    y = fn(x)
    return _residual_add(y, x)


# ----------------------------------------------------------------------------
# Demo: ResidualConnect around a small (pre-norm) MLP, as used inside a ViT.
# ----------------------------------------------------------------------------
def _make_mlp_fn(key, dim, hidden):
    k1, k2 = jax.random.split(key)
    w1 = jax.random.normal(k1, (dim, hidden), jnp.float32) / (dim ** 0.5)
    b1 = jnp.zeros((hidden,), jnp.float32)
    w2 = jax.random.normal(k2, (hidden, dim), jnp.float32) / (hidden ** 0.5)
    b2 = jnp.zeros((dim,), jnp.float32)

    def fn(x):
        # LayerNorm -> Linear -> GELU -> Linear  (typical ResidualConnect(fn))
        mean = jnp.mean(x, axis=-1, keepdims=True)
        var = jnp.mean((x - mean) ** 2, axis=-1, keepdims=True)
        h = (x - mean) * jax.lax.rsqrt(var + 1e-5)
        h = jax.nn.gelu(h @ w1 + b1)
        return h @ w2 + b2

    return fn


if __name__ == "__main__":
    key = jax.random.PRNGKey(0)
    kx, kf, kx2, kx3 = jax.random.split(key, 4)

    # 1) Small ViT-ish shape: batch=2, seq=8, hidden=32 (lane-dense repack to
    #    a 512-wide view since D=32 < 128).
    B, S, D = 2, 8, 32
    x = jax.random.normal(kx, (B, S, D), jnp.float32)
    fn = _make_mlp_fn(kf, D, 2 * D)
    out = jax.block_until_ready(residual_connect_forward(x, fn))
    assert out.shape == x.shape
    ref = fn(x) + x
    assert jnp.allclose(out, ref, atol=1e-5, rtol=1e-5), "mismatch (MLP fn)"

    # 2) Non-tile-divisible rows (ViT-Small-ish, 197 tokens) exercise the
    #    ragged-final-block path (no jnp.pad copies).
    x2 = jax.random.normal(kx2, (2, 197, 384), jnp.float32)
    fn2 = jnp.tanh
    out2 = jax.block_until_ready(residual_connect_forward(x2, fn2))
    assert out2.shape == x2.shape
    assert jnp.allclose(out2, fn2(x2) + x2, atol=1e-5, rtol=1e-5), "mismatch (tanh fn)"

    # 3) bf16 path exercises 16-row sublane granularity + ragged block.
    x3 = jax.random.normal(kx3, (4, 24, 192), jnp.float32).astype(jnp.bfloat16)
    fn3 = lambda t: t * jnp.bfloat16(2.0)
    out3 = jax.block_until_ready(residual_connect_forward(x3, fn3))
    assert out3.shape == x3.shape
    ref3 = fn3(x3) + x3
    assert jnp.allclose(out3.astype(jnp.float32), ref3.astype(jnp.float32),
                        atol=1e-2, rtol=1e-2), "mismatch (bf16 fn)"

    print("KERNEL_OK")
</pallas_src>

<mosaic_0001>
module attributes {stable_mosaic.version = 11 : i64} {
  func.func @_residual_add_kernel(%arg0: i32, %arg1: memref<1x512xf32, #tpu.memory_space<vmem>>, %arg2: memref<1x512xf32, #tpu.memory_space<vmem>>, %arg3: memref<1x512xf32, #tpu.memory_space<vmem>>) attributes {dimension_semantics = [#tpu.dimension_semantics<parallel>], iteration_bounds = array<i64: 1>, scalar_prefetch = 0 : i64, scratch_operands = 0 : i64, tpu.core_type = #tpu.core_type<tc>, window_params = [{transform_indices = @transform_0, window_bounds = array<i64: 1, 512>}, {transform_indices = @transform_1, window_bounds = array<i64: 1, 512>}, {transform_indices = @transform_2, window_bounds = array<i64: 1, 512>}]} {
    %c0 = arith.constant 0 : index
    %c0_0 = arith.constant 0 : index
    %0 = vector.load %arg1[%c0, %c0_0] : memref<1x512xf32, #tpu.memory_space<vmem>>, vector<1x512xf32>
    %c0_1 = arith.constant 0 : index
    %c0_2 = arith.constant 0 : index
    %1 = vector.load %arg2[%c0_1, %c0_2] : memref<1x512xf32, #tpu.memory_space<vmem>>, vector<1x512xf32>
    %2 = arith.addf %0, %1 : vector<1x512xf32>
    %c0_3 = arith.constant 0 : index
    %c0_4 = arith.constant 0 : index
    %3 = vector.load %arg3[%c0_3, %c0_4] : memref<1x512xf32, #tpu.memory_space<vmem>>, vector<1x512xf32>
    tpu.vector_store %arg3[%c0_3, %c0_4], %2 {strides = array<i32>} : memref<1x512xf32, #tpu.memory_space<vmem>>, vector<1x512xf32>,
    return
  }
  func.func @transform_0(%arg0: i32) -> (i32, i32) {
    %c0_i32 = arith.constant 0 : i32
    %c0_i32_0 = arith.constant 0 : i32
    return %arg0, %c0_i32 : i32, i32
  }
  func.func @transform_1(%arg0: i32) -> (i32, i32) {
    %c0_i32 = arith.constant 0 : i32
    %c0_i32_0 = arith.constant 0 : i32
    return %arg0, %c0_i32 : i32, i32
  }
  func.func @transform_2(%arg0: i32) -> (i32, i32) {
    %c0_i32 = arith.constant 0 : i32
    %c0_i32_0 = arith.constant 0 : i32
    return %arg0, %c0_i32 : i32, i32
  }
}

</mosaic_0001>

<llo_original>
// kernel: tpu_custom_call.1
$region0: #{tpu_custom_call.1}
  #allocation0 [shape = 'u32[]', space=smem, size = 0x4, offset = 0x4, fixed_abs, tag = 'smem constant byte address 0x4 - core index']
  #allocation1 [shape = 'u32[72,128]{1,0:T(1,128)}', space=vmem, size = 0x9000, scoped, tag = 'internal scratch']
  %s0 = inlined_call_operand.hbm [shape: f32[1,512], index: 0, kind: input, shape index: {}, may-alias: {0,2}]
  %s1 = inlined_call_operand.vmem [shape: f32[1,512], index: 1, kind: input, shape index: {}]
  %s2 = inlined_call_operand.hbm [shape: f32[1,512], index: 2, kind: output, shape index: {}, may-alias: {0,2}]
  %s3 = sld [smem:[#allocation0]]
  $region22: #{tpu_custom_call.1} parent=0
    _
  %s5 = ssub.s32 1, %s3
  %s6 = scalar_select 0, %s5, %s3
  $region1: #{tpu_custom_call.1} parent=0
    #allocation2 [shape = 'u8[2048]{0}', space=vmem, size = 0x800, scoped, tag = 'input window, operand 0, single buffered']
    #allocation3 [shape = 's32[1]{0}', space=sflag, size = 0x4, scoped, tag = 'scoped memory for tpu_custom_call.1']
    #allocation4 [shape = 's32[1]{0}', space=sflag, size = 0x4, scoped, tag = 'scoped memory for tpu_custom_call.1']
    #allocation5 [shape = 'u8[2048]{0}', space=vmem, size = 0x800, scoped, tag = 'output window, operand 0, single buffered']
    %7 = vsyncpa [#allocation3], 0
    %8 = vsyncpa [#allocation4], 0
    // Predicated region
    $region2: #{tpu_custom_call.1} parent=1 // pred_check
      _
    $region3: #{tpu_custom_call.1} parent=1 // pred_check_branch
      %10 = sbr.rel (0) target = $region5
    $region4: #{tpu_custom_call.1} parent=1 // pred_region
      %12 = vsyncadd [#allocation3], 0
      %s14 = sshll.u32 %s0, 4
      %s15 = int_to_ptr.hbm [resolvable:$true] %s14
      %s16 = sshll.u32 [#allocation2], 4
      %s17 = int_to_ptr.vmem [resolvable:$true] %s16
      %19 = dma.hbm_to_vmem [thread:$0]  %s15, 64, %s17, [#allocation3]
    $region5: #{tpu_custom_call.1} parent=1 // pred_fallthru
      _
    // Predicated region
    $region6: #{tpu_custom_call.1} parent=1 // pred_check
      _
    $region7: #{tpu_custom_call.1} parent=1 // pred_check_branch
      %21 = sbr.rel (0) target = $region9
    $region8: #{tpu_custom_call.1} parent=1 // pred_region
      _
    $region9: #{tpu_custom_call.1} parent=1 // pred_fallthru
      _
    // Predicated region
    $region10: #{tpu_custom_call.1} parent=1 // pred_check
      _
    $region11: #{tpu_custom_call.1} parent=1 // pred_check_branch
      %23 = sbr.rel (0) target = $region13
    $region12: #{tpu_custom_call.1} parent=1 // pred_region
      %25 = dma.done [#allocation3], 64
    $region13: #{tpu_custom_call.1} parent=1 // pred_fallthru
      _
    %v26 = vld [vmem:[#allocation2] sm:$0xf]
    %v27 = vld [vmem:[%s1] sm:$0xf]
    %v28 = vadd.f32 %v26, %v27
    %v29 = vlaneseq
    %vm30 = vcmp.ge.s32.totalorder %v29, 0
    %vm31 = vcmp.lt.s32.totalorder %v29, 512
    %vm32 = vmand %vm30, %vm31
    %33 = vst.msk [vmem:[#allocation5] sm:$0xf] %vm32, %v28
    // Predicated region
    $region14: #{tpu_custom_call.1} parent=1 // pred_check
      _
    $region15: #{tpu_custom_call.1} parent=1 // pred_check_branch
      %35 = sbr.rel (0) target = $region17
    $region16: #{tpu_custom_call.1} parent=1 // pred_region
      %37 = vsyncadd [#allocation4], 0
      %s39 = sshll.u32 [#allocation5], 4
      %s40 = int_to_ptr.vmem [resolvable:$true] %s39
      %s41 = sshll.u32 %s2, 4
      %s42 = int_to_ptr.hbm [resolvable:$true] %s41
      %44 = dma.vmem_to_hbm [thread:$0]  %s40, 64, %s42, [#allocation4]
    $region17: #{tpu_custom_call.1} parent=1 // pred_fallthru
      _
    // Predicated region
    $region18: #{tpu_custom_call.1} parent=1 // pred_check
      _
    $region19: #{tpu_custom_call.1} parent=1 // pred_check_branch
      %46 = sbr.rel (0) target = $region21
    $region20: #{tpu_custom_call.1} parent=1 // pred_region
      %48 = dma.done [#allocation4], 64
    $region21: #{tpu_custom_call.1} parent=1 // pred_fallthru
      _
    %49 = vsyncpa [#allocation3], 1
    %50 = vsyncpa [#allocation4], 1

</llo_original>
